<compile_context>
chip_gen: v7x
topology: tpu7x:2x2x1
jax: 0.10.0
libtpu: 0.0.40
codegen_flags: <defaults>
</compile_context>

<pallas_src>
import functools
import math

import jax
import jax.numpy as jnp
from jax.experimental import pallas as pl
from jax.experimental.pallas import tpu as pltpu


def _is_pow2(n):
    return n > 0 and (n & (n - 1)) == 0


def _round_up(n, m):
    return (n + m - 1) // m * m


def _repvgg_kernel(x_ref, w_ref, o_ref, col_ref, *, H, W, HWp):
    """One grid step: NB whole images, channels-outer / spatial-on-lanes.

    x_ref  : (Cin,   NB*HWp)   activations; lane = flattened (image, h, w), each
                               image padded to HWp lanes (HWp % 128 == 0)
    w_ref  : (Cout,  9*Cin)    fused weights, column index = (kh*3+kw)*Cin + cin
    o_ref  : (Cout,  NB*HWp)   output block (lane-dense)
    col_ref: (9*Cin, NB*HWp)   im2col VMEM scratch
    """
    Cin, TP = x_ref.shape
    x = x_ref[...]

    # Per-lane spatial coordinates (cheap bit ops when H/W are powers of two).
    q = jax.lax.broadcasted_iota(jnp.int32, (1, TP), 1)
    p = (q & (HWp - 1)) if _is_pow2(HWp) else (q % HWp)
    if _is_pow2(W):
        w_idx = p & (W - 1)
        h_idx = p >> (W.bit_length() - 1)
    else:
        w_idx = p % W
        h_idx = p // W

    # 9 taps: lane rotate (XLU) + boundary mask (VPU) -> im2col rows.
    for kh in range(3):
        dh = kh - 1
        for kw in range(3):
            dw = kw - 1
            t = kh * 3 + kw
            s = dh * W + dw                                   # flat source offset
            if s == 0:
                tap = x                                       # center tap: no shift
            else:
                rolled = pltpu.roll(x, (-s) % TP, axis=1)     # out[q] = x[q + s]
                valid = ((h_idx + dh >= 0) & (h_idx + dh < H) &
                         (w_idx + dw >= 0) & (w_idx + dw < W))
                tap = jnp.where(valid, rolled, jnp.zeros_like(rolled))
            col_ref[t * Cin:(t + 1) * Cin, :] = tap

    # Single fused matmul (M=Cout, K=9*Cin, N=TP) straight into the output.
    o_ref[...] = jnp.dot(w_ref[...], col_ref[...],
                         preferred_element_type=jnp.float32).astype(o_ref.dtype)


def _vmem_capacity_bytes():
    """Best-effort per-core VMEM capacity; conservative (v7x) fallback."""
    try:
        info = pltpu.get_tpu_info()
        for attr in ("vmem_capacity_bytes", "vmem_size_bytes", "vmem_bytes"):
            v = getattr(info, attr, None)
            if v:
                return int(v)
    except Exception:
        pass
    return 64 << 20


def _pick_images_per_block(N, HWp, Cin, Cout, block_budget_bytes, min_steps=4):
    """Largest divisor of N whose block fits the budget AND keeps >= min_steps
    grid steps (pipelining / megacore).  HWp % 128 == 0, so any divisor is a
    legal lane extent (no whole-tensor fallback)."""
    # per-image VMEM (f32): dbl-buffered in/out + im2col scratch + per-tap temps
    bytes_per_image = 4 * HWp * (2 * Cin + 2 * Cout + 9 * Cin + 2 * Cin)
    cap_mem = max(1, block_budget_bytes // bytes_per_image)
    cap_steps = max(1, N // min(min_steps, N))
    cap = min(cap_mem, cap_steps)
    nb = 1
    for d in range(1, N + 1):
        if N % d == 0 and d <= cap:
            nb = d
    return nb


def repvgg_block_forward(x_nchw, w_dense, w_1x1, stride=1):
    """Forward of OnlyConvRepVGGBlock (deploy=False, bias=False, groups=1).

    x_nchw : (N, Cin, H, W)    float32, PyTorch NCHW convention
    w_dense: (Cout, Cin, 3, 3) rbr_dense.weight (OIHW)
    w_1x1  : (Cout, Cin, 1, 1) rbr_1x1.weight   (OIHW)
    """
    assert stride == 1  # identity branch in the reference module requires stride==1
    N, Cin, H, W = x_nchw.shape
    Cout = w_dense.shape[0]
    HW = H * W
    HWp = _round_up(HW, 128)          # per-image lane extent, 128-aligned

    # --- fuse the three branches into one equivalent 3x3 kernel (exact) ---
    w_fused = w_dense + jnp.pad(w_1x1, ((0, 0), (0, 0), (1, 1), (1, 1)))
    if Cout == Cin:  # rbr_identity branch active (stride == 1 asserted above)
        w_fused = w_fused.at[:, :, 1, 1].add(jnp.eye(Cin, dtype=w_fused.dtype))
    # fused-matmul weight layout: (Cout, 9*Cin), column = (kh*3+kw)*Cin + cin
    w_flat = jnp.transpose(w_fused, (0, 2, 3, 1)).reshape(Cout, 9 * Cin)

    # --- channels-outer, lane-dense activations; each image padded to HWp ---
    x_cp = jnp.transpose(x_nchw, (1, 0, 2, 3)).reshape(Cin, N, HW)
    if HWp != HW:
        x_cp = jnp.pad(x_cp, ((0, 0), (0, 0), (0, HWp - HW)))
    x_cp = x_cp.reshape(Cin, N * HWp)

    # --- generation-aware block sizing ---
    vmem_cap = _vmem_capacity_bytes()
    block_budget = max(4 << 20, min(24 << 20, vmem_cap // 5))   # ~24MiB v5e/v6e, ~12MiB v7x
    NB = _pick_images_per_block(N, HWp, Cin, Cout, block_budget)
    TP = NB * HWp
    grid = (N // NB,)

    kernel = functools.partial(_repvgg_kernel, H=H, W=W, HWp=HWp)

    flops = 2 * N * HWp * 9 * Cin * Cout
    bytes_accessed = 4 * (N * HWp * (Cin + Cout) + Cout * 9 * Cin)

    out_cp = pl.pallas_call(
        kernel,
        out_shape=jax.ShapeDtypeStruct((Cout, N * HWp), x_nchw.dtype),
        grid_spec=pltpu.PrefetchScalarGridSpec(
            num_scalar_prefetch=0,
            grid=grid,  # one step per block of NB whole images
            in_specs=[
                pl.BlockSpec((Cin, TP), lambda j: (0, j)),
                pl.BlockSpec((Cout, 9 * Cin), lambda j: (0, 0)),
            ],
            out_specs=pl.BlockSpec((Cout, TP), lambda j: (0, j)),
            scratch_shapes=[pltpu.VMEM((9 * Cin, TP), x_nchw.dtype)],
        ),
        compiler_params=pltpu.CompilerParams(
            dimension_semantics=("parallel",),
            vmem_limit_bytes=int(min(vmem_cap * 3 // 4, 96 << 20)),
        ),
        cost_estimate=pl.CostEstimate(flops=flops, transcendentals=0,
                                      bytes_accessed=bytes_accessed),
    )(x_cp, w_flat)

    # strip per-image lane padding, back to PyTorch NCHW
    out = out_cp.reshape(Cout, N, HWp)
    if HWp != HW:
        out = out[:, :, :HW]
    return jnp.transpose(out.reshape(Cout, N, H, W), (1, 0, 2, 3))


if __name__ == "__main__":
    key = jax.random.PRNGKey(0)
    kx, kd, k1 = jax.random.split(key, 3)

    # module config: in_channels=4, out_channels=4, kernel_size=3, stride=1, padding=1
    N, Cin, H, W = 2, 4, 16, 16
    Cout = 4

    x = jax.random.normal(kx, (N, Cin, H, W), dtype=jnp.float32)
    w_dense = 0.1 * jax.random.normal(kd, (Cout, Cin, 3, 3), dtype=jnp.float32)
    w_1x1 = 0.1 * jax.random.normal(k1, (Cout, Cin, 1, 1), dtype=jnp.float32)

    fwd = jax.jit(repvgg_block_forward)
    out = jax.block_until_ready(fwd(x, w_dense, w_1x1))

    # Reference: the three explicit branches, exactly as in the PyTorch forward().
    dense_out = jax.lax.conv_general_dilated(
        x, w_dense, window_strides=(1, 1), padding=((1, 1), (1, 1)),
        dimension_numbers=("NCHW", "OIHW", "NCHW"))
    one_out = jax.lax.conv_general_dilated(
        x, w_1x1, window_strides=(1, 1), padding=((0, 0), (0, 0)),
        dimension_numbers=("NCHW", "OIHW", "NCHW"))
    ref = dense_out + one_out + x  # rbr_identity active (Cin == Cout, stride == 1)

    assert out.shape == ref.shape
    assert jnp.allclose(out, ref, atol=1e-4, rtol=1e-4), "mismatch vs reference conv"
    print("KERNEL_OK")
</pallas_src>

<mosaic_0001>
module attributes {stable_mosaic.version = 11 : i64} {
  func.func @_repvgg_kernel(%arg0: i32, %arg1: memref<4x256xf32, #tpu.memory_space<vmem>>, %arg2: memref<4x36xf32, #tpu.memory_space<vmem>>, %arg3: memref<4x256xf32, #tpu.memory_space<vmem>>, %arg4: memref<36x256xf32, #tpu.memory_space<vmem>>) attributes {dimension_semantics = [#tpu.dimension_semantics<parallel>], iteration_bounds = array<i64: 2>, scalar_prefetch = 0 : i64, scratch_operands = 1 : i64, tpu.core_type = #tpu.core_type<tc>, window_params = [{transform_indices = @transform_0, window_bounds = array<i64: 4, 256>}, {pipeline_mode = #tpu.pipeline_mode<synchronous>, transform_indices = @transform_1, window_bounds = array<i64: 4, 36>}, {transform_indices = @transform_2, window_bounds = array<i64: 4, 256>}]} {
    %c0 = arith.constant 0 : index
    %c0_0 = arith.constant 0 : index
    %0 = vector.load %arg1[%c0, %c0_0] : memref<4x256xf32, #tpu.memory_space<vmem>>, vector<4x256xf32>
    %1 = tpu.iota {dimensions = array<i32: 1>} : vector<1x256xi32>
    %c255_i32 = arith.constant 255 : i32
    %2 = vector.broadcast %c255_i32 : i32 to vector<1x256xi32>
    %3 = arith.andi %1, %2 : vector<1x256xi32>
    %c15_i32 = arith.constant 15 : i32
    %4 = vector.broadcast %c15_i32 : i32 to vector<1x256xi32>
    %5 = arith.andi %3, %4 : vector<1x256xi32>
    %c4_i32 = arith.constant 4 : i32
    %6 = vector.broadcast %c4_i32 : i32 to vector<1x256xi32>
    %7 = arith.shrsi %3, %6 : vector<1x256xi32>
    %c17_i32 = arith.constant 17 : i32
    %8 = tpu.dynamic_rotate %0 by %c17_i32 dim 1 : vector<4x256xf32>, i32 -> vector<4x256xf32>
    %c-1_i32 = arith.constant -1 : i32
    %9 = vector.broadcast %c-1_i32 : i32 to vector<1x256xi32>
    %10 = arith.addi %7, %9 : vector<1x256xi32>
    %c0_i32 = arith.constant 0 : i32
    %11 = vector.broadcast %c0_i32 : i32 to vector<1x256xi32>
    %12 = arith.cmpi sge, %10, %11 : vector<1x256xi32>
    %c-1_i32_1 = arith.constant -1 : i32
    %13 = vector.broadcast %c-1_i32_1 : i32 to vector<1x256xi32>
    %14 = arith.addi %7, %13 : vector<1x256xi32>
    %c16_i32 = arith.constant 16 : i32
    %15 = vector.broadcast %c16_i32 : i32 to vector<1x256xi32>
    %16 = arith.cmpi slt, %14, %15 : vector<1x256xi32>
    %17 = arith.andi %12, %16 : vector<1x256xi1>
    %c-1_i32_2 = arith.constant -1 : i32
    %18 = vector.broadcast %c-1_i32_2 : i32 to vector<1x256xi32>
    %19 = arith.addi %5, %18 : vector<1x256xi32>
    %c0_i32_3 = arith.constant 0 : i32
    %20 = vector.broadcast %c0_i32_3 : i32 to vector<1x256xi32>
    %21 = arith.cmpi sge, %19, %20 : vector<1x256xi32>
    %22 = arith.andi %17, %21 : vector<1x256xi1>
    %c-1_i32_4 = arith.constant -1 : i32
    %23 = vector.broadcast %c-1_i32_4 : i32 to vector<1x256xi32>
    %24 = arith.addi %5, %23 : vector<1x256xi32>
    %c16_i32_5 = arith.constant 16 : i32
    %25 = vector.broadcast %c16_i32_5 : i32 to vector<1x256xi32>
    %26 = arith.cmpi slt, %24, %25 : vector<1x256xi32>
    %27 = arith.andi %22, %26 : vector<1x256xi1>
    %cst = arith.constant 0.000000e+00 : f32
    %28 = vector.broadcast %cst : f32 to vector<4x256xf32>
    %29 = vector.shape_cast %27 : vector<1x256xi1> to vector<1x256xi1>
    %30 = vector.broadcast %29 : vector<1x256xi1> to vector<4x256xi1>
    %31 = arith.select %30, %8, %28 : vector<4x256xi1>, vector<4x256xf32>
    %c0_6 = arith.constant 0 : index
    %c0_7 = arith.constant 0 : index
    %32 = vector.load %arg4[%c0_6, %c0_7] : memref<36x256xf32, #tpu.memory_space<vmem>>, vector<4x256xf32>
    tpu.vector_store %arg4[%c0_6, %c0_7], %31 {strides = array<i32>} : memref<36x256xf32, #tpu.memory_space<vmem>>, vector<4x256xf32>,
    %c16_i32_8 = arith.constant 16 : i32
    %33 = tpu.dynamic_rotate %0 by %c16_i32_8 dim 1 : vector<4x256xf32>, i32 -> vector<4x256xf32>
    %c-1_i32_9 = arith.constant -1 : i32
    %34 = vector.broadcast %c-1_i32_9 : i32 to vector<1x256xi32>
    %35 = arith.addi %7, %34 : vector<1x256xi32>
    %c0_i32_10 = arith.constant 0 : i32
    %36 = vector.broadcast %c0_i32_10 : i32 to vector<1x256xi32>
    %37 = arith.cmpi sge, %35, %36 : vector<1x256xi32>
    %c-1_i32_11 = arith.constant -1 : i32
    %38 = vector.broadcast %c-1_i32_11 : i32 to vector<1x256xi32>
    %39 = arith.addi %7, %38 : vector<1x256xi32>
    %c16_i32_12 = arith.constant 16 : i32
    %40 = vector.broadcast %c16_i32_12 : i32 to vector<1x256xi32>
    %41 = arith.cmpi slt, %39, %40 : vector<1x256xi32>
    %42 = arith.andi %37, %41 : vector<1x256xi1>
    %c0_i32_13 = arith.constant 0 : i32
    %43 = vector.broadcast %c0_i32_13 : i32 to vector<1x256xi32>
    %44 = arith.addi %5, %43 : vector<1x256xi32>
    %c0_i32_14 = arith.constant 0 : i32
    %45 = vector.broadcast %c0_i32_14 : i32 to vector<1x256xi32>
    %46 = arith.cmpi sge, %44, %45 : vector<1x256xi32>
    %47 = arith.andi %42, %46 : vector<1x256xi1>
    %c0_i32_15 = arith.constant 0 : i32
    %48 = vector.broadcast %c0_i32_15 : i32 to vector<1x256xi32>
    %49 = arith.addi %5, %48 : vector<1x256xi32>
    %c16_i32_16 = arith.constant 16 : i32
    %50 = vector.broadcast %c16_i32_16 : i32 to vector<1x256xi32>
    %51 = arith.cmpi slt, %49, %50 : vector<1x256xi32>
    %52 = arith.andi %47, %51 : vector<1x256xi1>
    %cst_17 = arith.constant 0.000000e+00 : f32
    %53 = vector.broadcast %cst_17 : f32 to vector<4x256xf32>
    %54 = vector.shape_cast %52 : vector<1x256xi1> to vector<1x256xi1>
    %55 = vector.broadcast %54 : vector<1x256xi1> to vector<4x256xi1>
    %56 = arith.select %55, %33, %53 : vector<4x256xi1>, vector<4x256xf32>
    %c4 = arith.constant 4 : index
    %c0_18 = arith.constant 0 : index
    %57 = vector.load %arg4[%c4, %c0_18] : memref<36x256xf32, #tpu.memory_space<vmem>>, vector<4x256xf32>
    tpu.vector_store %arg4[%c4, %c0_18], %56 {strides = array<i32>} : memref<36x256xf32, #tpu.memory_space<vmem>>, vector<4x256xf32>,
    %c15_i32_19 = arith.constant 15 : i32
    %58 = tpu.dynamic_rotate %0 by %c15_i32_19 dim 1 : vector<4x256xf32>, i32 -> vector<4x256xf32>
    %c-1_i32_20 = arith.constant -1 : i32
    %59 = vector.broadcast %c-1_i32_20 : i32 to vector<1x256xi32>
    %60 = arith.addi %7, %59 : vector<1x256xi32>
    %c0_i32_21 = arith.constant 0 : i32
    %61 = vector.broadcast %c0_i32_21 : i32 to vector<1x256xi32>
    %62 = arith.cmpi sge, %60, %61 : vector<1x256xi32>
    %c-1_i32_22 = arith.constant -1 : i32
    %63 = vector.broadcast %c-1_i32_22 : i32 to vector<1x256xi32>
    %64 = arith.addi %7, %63 : vector<1x256xi32>
    %c16_i32_23 = arith.constant 16 : i32
    %65 = vector.broadcast %c16_i32_23 : i32 to vector<1x256xi32>
    %66 = arith.cmpi slt, %64, %65 : vector<1x256xi32>
    %67 = arith.andi %62, %66 : vector<1x256xi1>
    %c1_i32 = arith.constant 1 : i32
    %68 = vector.broadcast %c1_i32 : i32 to vector<1x256xi32>
    %69 = arith.addi %5, %68 : vector<1x256xi32>
    %c0_i32_24 = arith.constant 0 : i32
    %70 = vector.broadcast %c0_i32_24 : i32 to vector<1x256xi32>
    %71 = arith.cmpi sge, %69, %70 : vector<1x256xi32>
    %72 = arith.andi %67, %71 : vector<1x256xi1>
    %c1_i32_25 = arith.constant 1 : i32
    %73 = vector.broadcast %c1_i32_25 : i32 to vector<1x256xi32>
    %74 = arith.addi %5, %73 : vector<1x256xi32>
    %c16_i32_26 = arith.constant 16 : i32
    %75 = vector.broadcast %c16_i32_26 : i32 to vector<1x256xi32>
    %76 = arith.cmpi slt, %74, %75 : vector<1x256xi32>
    %77 = arith.andi %72, %76 : vector<1x256xi1>
    %cst_27 = arith.constant 0.000000e+00 : f32
    %78 = vector.broadcast %cst_27 : f32 to vector<4x256xf32>
    %79 = vector.shape_cast %77 : vector<1x256xi1> to vector<1x256xi1>
    %80 = vector.broadcast %79 : vector<1x256xi1> to vector<4x256xi1>
    %81 = arith.select %80, %58, %78 : vector<4x256xi1>, vector<4x256xf32>
    %c8 = arith.constant 8 : index
    %c0_28 = arith.constant 0 : index
    %82 = vector.load %arg4[%c8, %c0_28] : memref<36x256xf32, #tpu.memory_space<vmem>>, vector<4x256xf32>
    tpu.vector_store %arg4[%c8, %c0_28], %81 {strides = array<i32>} : memref<36x256xf32, #tpu.memory_space<vmem>>, vector<4x256xf32>,
    %c1_i32_29 = arith.constant 1 : i32
    %83 = tpu.dynamic_rotate %0 by %c1_i32_29 dim 1 : vector<4x256xf32>, i32 -> vector<4x256xf32>
    %c0_i32_30 = arith.constant 0 : i32
    %84 = vector.broadcast %c0_i32_30 : i32 to vector<1x256xi32>
    %85 = arith.addi %7, %84 : vector<1x256xi32>
    %c0_i32_31 = arith.constant 0 : i32
    %86 = vector.broadcast %c0_i32_31 : i32 to vector<1x256xi32>
    %87 = arith.cmpi sge, %85, %86 : vector<1x256xi32>
    %c0_i32_32 = arith.constant 0 : i32
    %88 = vector.broadcast %c0_i32_32 : i32 to vector<1x256xi32>
    %89 = arith.addi %7, %88 : vector<1x256xi32>
    %c16_i32_33 = arith.constant 16 : i32
    %90 = vector.broadcast %c16_i32_33 : i32 to vector<1x256xi32>
    %91 = arith.cmpi slt, %89, %90 : vector<1x256xi32>
    %92 = arith.andi %87, %91 : vector<1x256xi1>
    %c-1_i32_34 = arith.constant -1 : i32
    %93 = vector.broadcast %c-1_i32_34 : i32 to vector<1x256xi32>
    %94 = arith.addi %5, %93 : vector<1x256xi32>
    %c0_i32_35 = arith.constant 0 : i32
    %95 = vector.broadcast %c0_i32_35 : i32 to vector<1x256xi32>
    %96 = arith.cmpi sge, %94, %95 : vector<1x256xi32>
    %97 = arith.andi %92, %96 : vector<1x256xi1>
    %c-1_i32_36 = arith.constant -1 : i32
    %98 = vector.broadcast %c-1_i32_36 : i32 to vector<1x256xi32>
    %99 = arith.addi %5, %98 : vector<1x256xi32>
    %c16_i32_37 = arith.constant 16 : i32
    %100 = vector.broadcast %c16_i32_37 : i32 to vector<1x256xi32>
    %101 = arith.cmpi slt, %99, %100 : vector<1x256xi32>
    %102 = arith.andi %97, %101 : vector<1x256xi1>
    %cst_38 = arith.constant 0.000000e+00 : f32
    %103 = vector.broadcast %cst_38 : f32 to vector<4x256xf32>
    %104 = vector.shape_cast %102 : vector<1x256xi1> to vector<1x256xi1>
    %105 = vector.broadcast %104 : vector<1x256xi1> to vector<4x256xi1>
    %106 = arith.select %105, %83, %103 : vector<4x256xi1>, vector<4x256xf32>
    %c12 = arith.constant 12 : index
    %c0_39 = arith.constant 0 : index
    %107 = vector.load %arg4[%c12, %c0_39] : memref<36x256xf32, #tpu.memory_space<vmem>>, vector<4x256xf32>
    tpu.vector_store %arg4[%c12, %c0_39], %106 {strides = array<i32>} : memref<36x256xf32, #tpu.memory_space<vmem>>, vector<4x256xf32>,
    %c16 = arith.constant 16 : index
    %c0_40 = arith.constant 0 : index
    %108 = vector.load %arg4[%c16, %c0_40] : memref<36x256xf32, #tpu.memory_space<vmem>>, vector<4x256xf32>
    tpu.vector_store %arg4[%c16, %c0_40], %0 {strides = array<i32>} : memref<36x256xf32, #tpu.memory_space<vmem>>, vector<4x256xf32>,
    %c255_i32_41 = arith.constant 255 : i32
    %109 = tpu.dynamic_rotate %0 by %c255_i32_41 dim 1 : vector<4x256xf32>, i32 -> vector<4x256xf32>
    %c0_i32_42 = arith.constant 0 : i32
    %110 = vector.broadcast %c0_i32_42 : i32 to vector<1x256xi32>
    %111 = arith.addi %7, %110 : vector<1x256xi32>
    %c0_i32_43 = arith.constant 0 : i32
    %112 = vector.broadcast %c0_i32_43 : i32 to vector<1x256xi32>
    %113 = arith.cmpi sge, %111, %112 : vector<1x256xi32>
    %c0_i32_44 = arith.constant 0 : i32
    %114 = vector.broadcast %c0_i32_44 : i32 to vector<1x256xi32>
    %115 = arith.addi %7, %114 : vector<1x256xi32>
    %c16_i32_45 = arith.constant 16 : i32
    %116 = vector.broadcast %c16_i32_45 : i32 to vector<1x256xi32>
    %117 = arith.cmpi slt, %115, %116 : vector<1x256xi32>
    %118 = arith.andi %113, %117 : vector<1x256xi1>
    %c1_i32_46 = arith.constant 1 : i32
    %119 = vector.broadcast %c1_i32_46 : i32 to vector<1x256xi32>
    %120 = arith.addi %5, %119 : vector<1x256xi32>
    %c0_i32_47 = arith.constant 0 : i32
    %121 = vector.broadcast %c0_i32_47 : i32 to vector<1x256xi32>
    %122 = arith.cmpi sge, %120, %121 : vector<1x256xi32>
    %123 = arith.andi %118, %122 : vector<1x256xi1>
    %c1_i32_48 = arith.constant 1 : i32
    %124 = vector.broadcast %c1_i32_48 : i32 to vector<1x256xi32>
    %125 = arith.addi %5, %124 : vector<1x256xi32>
    %c16_i32_49 = arith.constant 16 : i32
    %126 = vector.broadcast %c16_i32_49 : i32 to vector<1x256xi32>
    %127 = arith.cmpi slt, %125, %126 : vector<1x256xi32>
    %128 = arith.andi %123, %127 : vector<1x256xi1>
    %cst_50 = arith.constant 0.000000e+00 : f32
    %129 = vector.broadcast %cst_50 : f32 to vector<4x256xf32>
    %130 = vector.shape_cast %128 : vector<1x256xi1> to vector<1x256xi1>
    %131 = vector.broadcast %130 : vector<1x256xi1> to vector<4x256xi1>
    %132 = arith.select %131, %109, %129 : vector<4x256xi1>, vector<4x256xf32>
    %c20 = arith.constant 20 : index
    %c0_51 = arith.constant 0 : index
    %133 = vector.load %arg4[%c20, %c0_51] : memref<36x256xf32, #tpu.memory_space<vmem>>, vector<4x256xf32>
    tpu.vector_store %arg4[%c20, %c0_51], %132 {strides = array<i32>} : memref<36x256xf32, #tpu.memory_space<vmem>>, vector<4x256xf32>,
    %c241_i32 = arith.constant 241 : i32
    %134 = tpu.dynamic_rotate %0 by %c241_i32 dim 1 : vector<4x256xf32>, i32 -> vector<4x256xf32>
    %c1_i32_52 = arith.constant 1 : i32
    %135 = vector.broadcast %c1_i32_52 : i32 to vector<1x256xi32>
    %136 = arith.addi %7, %135 : vector<1x256xi32>
    %c0_i32_53 = arith.constant 0 : i32
    %137 = vector.broadcast %c0_i32_53 : i32 to vector<1x256xi32>
    %138 = arith.cmpi sge, %136, %137 : vector<1x256xi32>
    %c1_i32_54 = arith.constant 1 : i32
    %139 = vector.broadcast %c1_i32_54 : i32 to vector<1x256xi32>
    %140 = arith.addi %7, %139 : vector<1x256xi32>
    %c16_i32_55 = arith.constant 16 : i32
    %141 = vector.broadcast %c16_i32_55 : i32 to vector<1x256xi32>
    %142 = arith.cmpi slt, %140, %141 : vector<1x256xi32>
    %143 = arith.andi %138, %142 : vector<1x256xi1>
    %c-1_i32_56 = arith.constant -1 : i32
    %144 = vector.broadcast %c-1_i32_56 : i32 to vector<1x256xi32>
    %145 = arith.addi %5, %144 : vector<1x256xi32>
    %c0_i32_57 = arith.constant 0 : i32
    %146 = vector.broadcast %c0_i32_57 : i32 to vector<1x256xi32>
    %147 = arith.cmpi sge, %145, %146 : vector<1x256xi32>
    %148 = arith.andi %143, %147 : vector<1x256xi1>
    %c-1_i32_58 = arith.constant -1 : i32
    %149 = vector.broadcast %c-1_i32_58 : i32 to vector<1x256xi32>
    %150 = arith.addi %5, %149 : vector<1x256xi32>
    %c16_i32_59 = arith.constant 16 : i32
    %151 = vector.broadcast %c16_i32_59 : i32 to vector<1x256xi32>
    %152 = arith.cmpi slt, %150, %151 : vector<1x256xi32>
    %153 = arith.andi %148, %152 : vector<1x256xi1>
    %cst_60 = arith.constant 0.000000e+00 : f32
    %154 = vector.broadcast %cst_60 : f32 to vector<4x256xf32>
    %155 = vector.shape_cast %153 : vector<1x256xi1> to vector<1x256xi1>
    %156 = vector.broadcast %155 : vector<1x256xi1> to vector<4x256xi1>
    %157 = arith.select %156, %134, %154 : vector<4x256xi1>, vector<4x256xf32>
    %c24 = arith.constant 24 : index
    %c0_61 = arith.constant 0 : index
    %158 = vector.load %arg4[%c24, %c0_61] : memref<36x256xf32, #tpu.memory_space<vmem>>, vector<4x256xf32>
    tpu.vector_store %arg4[%c24, %c0_61], %157 {strides = array<i32>} : memref<36x256xf32, #tpu.memory_space<vmem>>, vector<4x256xf32>,
    %c240_i32 = arith.constant 240 : i32
    %159 = tpu.dynamic_rotate %0 by %c240_i32 dim 1 : vector<4x256xf32>, i32 -> vector<4x256xf32>
    %c1_i32_62 = arith.constant 1 : i32
    %160 = vector.broadcast %c1_i32_62 : i32 to vector<1x256xi32>
    %161 = arith.addi %7, %160 : vector<1x256xi32>
    %c0_i32_63 = arith.constant 0 : i32
    %162 = vector.broadcast %c0_i32_63 : i32 to vector<1x256xi32>
    %163 = arith.cmpi sge, %161, %162 : vector<1x256xi32>
    %c1_i32_64 = arith.constant 1 : i32
    %164 = vector.broadcast %c1_i32_64 : i32 to vector<1x256xi32>
    %165 = arith.addi %7, %164 : vector<1x256xi32>
    %c16_i32_65 = arith.constant 16 : i32
    %166 = vector.broadcast %c16_i32_65 : i32 to vector<1x256xi32>
    %167 = arith.cmpi slt, %165, %166 : vector<1x256xi32>
    %168 = arith.andi %163, %167 : vector<1x256xi1>
    %c0_i32_66 = arith.constant 0 : i32
    %169 = vector.broadcast %c0_i32_66 : i32 to vector<1x256xi32>
    %170 = arith.addi %5, %169 : vector<1x256xi32>
    %c0_i32_67 = arith.constant 0 : i32
    %171 = vector.broadcast %c0_i32_67 : i32 to vector<1x256xi32>
    %172 = arith.cmpi sge, %170, %171 : vector<1x256xi32>
    %173 = arith.andi %168, %172 : vector<1x256xi1>
    %c0_i32_68 = arith.constant 0 : i32
    %174 = vector.broadcast %c0_i32_68 : i32 to vector<1x256xi32>
    %175 = arith.addi %5, %174 : vector<1x256xi32>
    %c16_i32_69 = arith.constant 16 : i32
    %176 = vector.broadcast %c16_i32_69 : i32 to vector<1x256xi32>
    %177 = arith.cmpi slt, %175, %176 : vector<1x256xi32>
    %178 = arith.andi %173, %177 : vector<1x256xi1>
    %cst_70 = arith.constant 0.000000e+00 : f32
    %179 = vector.broadcast %cst_70 : f32 to vector<4x256xf32>
    %180 = vector.shape_cast %178 : vector<1x256xi1> to vector<1x256xi1>
    %181 = vector.broadcast %180 : vector<1x256xi1> to vector<4x256xi1>
    %182 = arith.select %181, %159, %179 : vector<4x256xi1>, vector<4x256xf32>
    %c28 = arith.constant 28 : index
    %c0_71 = arith.constant 0 : index
    %183 = vector.load %arg4[%c28, %c0_71] : memref<36x256xf32, #tpu.memory_space<vmem>>, vector<4x256xf32>
    tpu.vector_store %arg4[%c28, %c0_71], %182 {strides = array<i32>} : memref<36x256xf32, #tpu.memory_space<vmem>>, vector<4x256xf32>,
    %c239_i32 = arith.constant 239 : i32
    %184 = tpu.dynamic_rotate %0 by %c239_i32 dim 1 : vector<4x256xf32>, i32 -> vector<4x256xf32>
    %c1_i32_72 = arith.constant 1 : i32
    %185 = vector.broadcast %c1_i32_72 : i32 to vector<1x256xi32>
    %186 = arith.addi %7, %185 : vector<1x256xi32>
    %c0_i32_73 = arith.constant 0 : i32
    %187 = vector.broadcast %c0_i32_73 : i32 to vector<1x256xi32>
    %188 = arith.cmpi sge, %186, %187 : vector<1x256xi32>
    %c1_i32_74 = arith.constant 1 : i32
    %189 = vector.broadcast %c1_i32_74 : i32 to vector<1x256xi32>
    %190 = arith.addi %7, %189 : vector<1x256xi32>
    %c16_i32_75 = arith.constant 16 : i32
    %191 = vector.broadcast %c16_i32_75 : i32 to vector<1x256xi32>
    %192 = arith.cmpi slt, %190, %191 : vector<1x256xi32>
    %193 = arith.andi %188, %192 : vector<1x256xi1>
    %c1_i32_76 = arith.constant 1 : i32
    %194 = vector.broadcast %c1_i32_76 : i32 to vector<1x256xi32>
    %195 = arith.addi %5, %194 : vector<1x256xi32>
    %c0_i32_77 = arith.constant 0 : i32
    %196 = vector.broadcast %c0_i32_77 : i32 to vector<1x256xi32>
    %197 = arith.cmpi sge, %195, %196 : vector<1x256xi32>
    %198 = arith.andi %193, %197 : vector<1x256xi1>
    %c1_i32_78 = arith.constant 1 : i32
    %199 = vector.broadcast %c1_i32_78 : i32 to vector<1x256xi32>
    %200 = arith.addi %5, %199 : vector<1x256xi32>
    %c16_i32_79 = arith.constant 16 : i32
    %201 = vector.broadcast %c16_i32_79 : i32 to vector<1x256xi32>
    %202 = arith.cmpi slt, %200, %201 : vector<1x256xi32>
    %203 = arith.andi %198, %202 : vector<1x256xi1>
    %cst_80 = arith.constant 0.000000e+00 : f32
    %204 = vector.broadcast %cst_80 : f32 to vector<4x256xf32>
    %205 = vector.shape_cast %203 : vector<1x256xi1> to vector<1x256xi1>
    %206 = vector.broadcast %205 : vector<1x256xi1> to vector<4x256xi1>
    %207 = arith.select %206, %184, %204 : vector<4x256xi1>, vector<4x256xf32>
    %c32 = arith.constant 32 : index
    %c0_81 = arith.constant 0 : index
    %208 = vector.load %arg4[%c32, %c0_81] : memref<36x256xf32, #tpu.memory_space<vmem>>, vector<4x256xf32>
    tpu.vector_store %arg4[%c32, %c0_81], %207 {strides = array<i32>} : memref<36x256xf32, #tpu.memory_space<vmem>>, vector<4x256xf32>,
    %c0_82 = arith.constant 0 : index
    %c0_83 = arith.constant 0 : index
    %209 = vector.load %arg2[%c0_82, %c0_83] : memref<4x36xf32, #tpu.memory_space<vmem>>, vector<4x36xf32>
    %c0_84 = arith.constant 0 : index
    %c0_85 = arith.constant 0 : index
    %210 = vector.load %arg4[%c0_84, %c0_85] : memref<36x256xf32, #tpu.memory_space<vmem>>, vector<36x256xf32>
    %cst_86 = arith.constant dense<0.000000e+00> : vector<4x256xf32>
    %211 = tpu.matmul %209, %210, %cst_86 {dimension_numbers = #tpu.dot_dimension_numbers<[1], [0], [0], [1], [0, 0, 1, 1], [], []>} : vector<4x36xf32>, vector<36x256xf32>, vector<4x256xf32> -> vector<4x256xf32>
    %c0_87 = arith.constant 0 : index
    %c0_88 = arith.constant 0 : index
    %212 = vector.load %arg3[%c0_87, %c0_88] : memref<4x256xf32, #tpu.memory_space<vmem>>, vector<4x256xf32>
    tpu.vector_store %arg3[%c0_87, %c0_88], %211 {strides = array<i32>} : memref<4x256xf32, #tpu.memory_space<vmem>>, vector<4x256xf32>,
    return
  }
  func.func @transform_0(%arg0: i32) -> (i32, i32) {
    %c0_i32 = arith.constant 0 : i32
    %c0_i32_0 = arith.constant 0 : i32
    return %c0_i32, %arg0 : i32, i32
  }
  func.func @transform_1(%arg0: i32) -> (i32, i32) {
    %c0_i32 = arith.constant 0 : i32
    %c0_i32_0 = arith.constant 0 : i32
    %c0_i32_1 = arith.constant 0 : i32
    return %c0_i32, %c0_i32_0 : i32, i32
  }
  func.func @transform_2(%arg0: i32) -> (i32, i32) {
    %c0_i32 = arith.constant 0 : i32
    %c0_i32_0 = arith.constant 0 : i32
    return %c0_i32, %arg0 : i32, i32
  }
}

</mosaic_0001>

<llo_original>
// kernel: repvgg_block_forward.1
$region0: #{repvgg_block_forward.1}
  #allocation0 [shape = 'u32[]', space=smem, size = 0x4, offset = 0x4, fixed_abs, tag = 'smem constant byte address 0x4 - core index']
  #allocation1 [shape = 'u32[144,128]{1,0:T(1,128)}', space=vmem, size = 0x12000, scoped, tag = 'internal scratch']
  #allocation2 [shape = 'f32[36,256]{1,0:T(8,128)}', space=vmem, size = 0xa000, scoped, tag = 'scratch operand']
  %s0 = inlined_call_operand.vmem [shape: f32[4,512], index: 0, kind: input, shape index: {}]
  %s1 = inlined_call_operand.vmem [shape: f32[4,36], index: 1, kind: input, shape index: {}]
  %s2 = inlined_call_operand.vmem [shape: f32[4,512], index: 2, kind: output, shape index: {}]
  %s3 = sld [smem:[#allocation0]]
  $region41: #{repvgg_block_forward.1} parent=0
    _
  %s5 = ssub.s32 1, %s3
  %s6 = scalar_select 0, %s5, %s3
  loop: start=0, step=1, limit=4
  $region2: #{repvgg_block_forward.1} parent=0 // loop_pre_header
    _
  $region3: #{repvgg_block_forward.1} parent=0 // loop_header
    %s8 = sphi 0, %s12
    %p9 = scmp.ge.s32.totalorder %s8, 4
    %s18 = sphi 0, %s20
    %s21 = sphi 0, %s18
    %s22 = sphi 0, %s21
    %s38 = sphi 0, %s22
    %s42 = sphi 0, %s42
    %s44 = sphi 0, %s42
    %s45 = sphi 0, %s44
    %s59 = sphi 0, %s45
    %s65 = sphi 0, %s67
    %s68 = sphi 0, %s65
    %s69 = sphi 0, %s68
    %s85 = sphi 0, %s69
  $region4: #{repvgg_block_forward.1} parent=0 // loop_header_branch
    %11 = sbr.rel (%p9) target = $region8
  $region5: #{repvgg_block_forward.1} parent=0 // loop_body
    %s13 = ssub.s32 %s8, 1
    %s14 = ssub.s32 %s8, 2
    %s15 = sadd.s32 %s8, 1
    %s16 = ssub.s32 %s8, %s15
    %p17 = scmp.eq.s32.totalorder %s16, 0
    %s19 = sadd.s32 %s18, 1
    %s20 = scalar_select %p17, %s18, %s19
    %p23 = pneg %p17
    %p24 = scmp.eq.s32.totalorder %s8, 1
    %p25 = por %p23, %p24
    %p26 = scmp.ne.s32.totalorder %s18, %s21
    %p27 = scmp.eq.s32.totalorder %s8, 0
    %p28 = por %p26, %p27
    %p29 = scmp.ne.s32.totalorder %s18, %s21
    %p30 = scmp.eq.s32.totalorder %s13, 1
    %p31 = por %p29, %p30
    %p32 = scmp.ne.s32.totalorder %s21, %s22
    %p33 = scmp.eq.s32.totalorder %s13, 0
    %p34 = por %p32, %p33
    %p35 = scmp.ne.s32.totalorder %s21, %s22
    %p36 = scmp.eq.s32.totalorder %s14, 1
    %p37 = por %p35, %p36
    %p39 = scmp.ne.s32.totalorder %s22, %s38
    %p40 = scmp.eq.s32.totalorder %s14, 0
    %p41 = por %p39, %p40
    %s43 = sadd.s32 %s42, 1
    %p46 = scmp.eq.s32.totalorder %s8, 1
    %p47 = scmp.ne.s32.totalorder %s42, %s44
    %p48 = scmp.eq.s32.totalorder %s8, 0
    %p49 = por %p47, %p48
    %p50 = scmp.ne.s32.totalorder %s42, %s44
    %p51 = scmp.eq.s32.totalorder %s13, 1
    %p52 = por %p50, %p51
    %p53 = scmp.ne.s32.totalorder %s44, %s45
    %p54 = scmp.eq.s32.totalorder %s13, 0
    %p55 = por %p53, %p54
    %p56 = scmp.ne.s32.totalorder %s44, %s45
    %p57 = scmp.eq.s32.totalorder %s14, 1
    %p58 = por %p56, %p57
    %p60 = scmp.ne.s32.totalorder %s45, %s59
    %p61 = scmp.eq.s32.totalorder %s14, 0
    %p62 = por %p60, %p61
    %s63 = ssub.s32 %s8, %s15
    %p64 = scmp.eq.s32.totalorder %s63, 0
    %s66 = sadd.s32 %s65, 1
    %s67 = scalar_select %p64, %s65, %s66
    %p70 = pneg %p64
    %p71 = scmp.eq.s32.totalorder %s8, 1
    %p72 = por %p70, %p71
    %p73 = scmp.ne.s32.totalorder %s65, %s68
    %p74 = scmp.eq.s32.totalorder %s8, 0
    %p75 = por %p73, %p74
    %p76 = scmp.ne.s32.totalorder %s65, %s68
    %p77 = scmp.eq.s32.totalorder %s13, 1
    %p78 = por %p76, %p77
    %p79 = scmp.ne.s32.totalorder %s68, %s69
    %p80 = scmp.eq.s32.totalorder %s13, 0
    %p81 = por %p79, %p80
    %p82 = scmp.ne.s32.totalorder %s68, %s69
    %p83 = scmp.eq.s32.totalorder %s14, 1
    %p84 = por %p82, %p83
    %p86 = scmp.ne.s32.totalorder %s69, %s85
    %p87 = scmp.eq.s32.totalorder %s14, 0
    %p88 = por %p86, %p87
    %p89 = scmp.le.s32.totalorder 1, %s8
    %p90 = scmp.lt.s32.totalorder %s8, 3
    %p91 = pnand %p89, %p90
    %p92 = pneg %p91
    // Predicated region
    $region9: #{repvgg_block_forward.1} parent=5 // pred_check
      _
    $region10: #{repvgg_block_forward.1} parent=5 // pred_check_branch
      %94 = sbr.rel (%p91) target = $region12
    $region11: #{repvgg_block_forward.1} parent=5 // pred_region
      %s95 = ssub.s32 %s8, 1
      // Predicated region
      $region13: #{repvgg_block_forward.1} parent=11 // pred_check
        %p96 = pneg %p55
      $region14: #{repvgg_block_forward.1} parent=11 // pred_check_branch
        %98 = sbr.rel (%p96) target = $region16
      $region15: #{repvgg_block_forward.1} parent=11 // pred_region
        _
      $region16: #{repvgg_block_forward.1} parent=11 // pred_fallthru
        _
    $region12: #{repvgg_block_forward.1} parent=5 // pred_fallthru
      _
    %p99 = scmp.lt.s32.totalorder %s8, 2
    // Predicated region
    $region17: #{repvgg_block_forward.1} parent=5 // pred_check
      %p100 = pneg %p99
    $region18: #{repvgg_block_forward.1} parent=5 // pred_check_branch
      %102 = sbr.rel (%p100) target = $region20
    $region19: #{repvgg_block_forward.1} parent=5 // pred_region
      // Predicated region
      $region21: #{repvgg_block_forward.1} parent=19 // pred_check
        %p103 = pneg %p28
      $region22: #{repvgg_block_forward.1} parent=19 // pred_check_branch
        %105 = sbr.rel (%p103) target = $region24
      $region23: #{repvgg_block_forward.1} parent=19 // pred_region
        %s106 = smul.u32 2, %s8
        %p107 = scmp.lt.s32.totalorder %s106, 3
        %s108 = scalar_select %p107, %s106, 3
        %s109 = smul.addr %s108, 4
        %s110 = scalar_lea.vmem %s0, %s109
        %s111 = smul.u32 2, %s8
      $region24: #{repvgg_block_forward.1} parent=19 // pred_fallthru
        _
    $region20: #{repvgg_block_forward.1} parent=5 // pred_fallthru
      _
    %p112 = scmp.le.s32.totalorder 1, %s8
    %p113 = scmp.lt.s32.totalorder %s8, 3
    %p114 = pnand %p112, %p113
    %p115 = pneg %p114
    // Predicated region
    $region25: #{repvgg_block_forward.1} parent=5 // pred_check
      _
    $region26: #{repvgg_block_forward.1} parent=5 // pred_check_branch
      %117 = sbr.rel (%p114) target = $region28
    $region27: #{repvgg_block_forward.1} parent=5 // pred_region
      %s118 = ssub.s32 %s8, 1
      %s119 = smul.u32 2, %s13
      %p120 = scmp.lt.s32.totalorder %s119, 3
      %s121 = scalar_select %p120, %s119, 3
      %s122 = smul.addr %s121, 4
      %s123 = scalar_lea.vmem %s0, %s122
      %p124 = pneg %p34
      %p125 = pneg %p31
      %p126 = pneg %p55
      %p127 = pneg %p52
      %p128 = pneg %p81
      %p129 = pneg %p78
      %s130 = smul.u32 2, %s13
      %p131 = scmp.lt.s32.totalorder %s130, 3
      %s132 = scalar_select %p131, %s130, 3
      %s133 = smul.addr %s132, 4
      %s134 = scalar_lea.vmem %s2, %s133
      %s135 = smul.u32 2, %s13
      %p136 = scmp.lt.s32.totalorder %s135, 3
      %s137 = scalar_select %p136, %s135, 3
      %s138 = smul.addr %s137, 4
      %s139 = scalar_lea.vmem %s0, %s138
      %s140 = smul.u32 2, %s13
      %s141 = smul.u32 2, %s13
      %p142 = scmp.lt.s32.totalorder %s141, 3
      %s143 = scalar_select %p142, %s141, 3
      %s144 = smul.addr %s143, 4
      %s145 = scalar_lea.vmem %s2, %s144
      %s146 = smul.u32 2, %s13
      %v147 = vld [vmem:[%s139] sm:$0xff]
      %v148 = vlaneseq
      %v149 = vand.u32 %v148, 127
      %v150 = vadd.s32 %v149, 128
      %v151 = vand.u32 %v149, 255
      %v152 = vand.u32 %v150, 255
      %v153 = vand.u32 %v151, 15
      %v154 = vand.u32 %v152, 15
      %v155 = vshra.s32 %v151, 4
      %v156 = vshra.s32 %v152, 4
      %v158 = vcombine.high %v147, %v147
      %160 = vrot.lane.b32.xlu0 %v147, 17
      %v161 = vpop.permute.xlu0 %160
      %162 = vrot.lane.b32.xlu0 %v158, 17
      %v163 = vpop.permute.xlu0 %162
      %vm164 = vcmp.lt.s32.totalorder %v149, 17
      %v165 = vsel %vm164, %v161, %v163
      %v166 = vsel %vm164, %v163, %v161
      %v167 = vadd.s32 %v155, 4294967295
      %v168 = vadd.s32 %v156, 4294967295
      %vm169 = vcmp.ge.s32.totalorder %v167, 0
      %vm170 = vcmp.ge.s32.totalorder %v168, 0
      %vm171 = vcmp.lt.s32.totalorder %v167, 16
      %vm172 = vcmp.lt.s32.totalorder %v168, 16
      %vm173 = vmand %vm169, %vm171
      %vm174 = vmand %vm170, %vm172
      %v175 = vadd.s32 %v153, 4294967295
      %v176 = vadd.s32 %v154, 4294967295
      %vm177 = vcmp.ge.s32.totalorder %v175, 0
      %vm178 = vcmp.ge.s32.totalorder %v176, 0
      %vm179 = vmand %vm173, %vm177
      %vm180 = vmand %vm174, %vm178
      %vm181 = vcmp.lt.s32.totalorder %v175, 16
      %vm182 = vcmp.lt.s32.totalorder %v176, 16
      %vm183 = vmand %vm179, %vm181
      %vm184 = vmand %vm180, %vm182
      %v185 = vsel %vm183, 1, 0
      %v186 = vsel %vm184, 1, 0
      %vm187 = vcmp.eq.s32.totalorder %v185, 1
      %vm188 = vcmp.eq.s32.totalorder %v186, 1
      %v189 = vsel %vm187, %v166, 0.0
      %v190 = vsel %vm188, %v165, 0.0
      %191 = vst [vmem:[#allocation2] sm:$0xf] %v189
      %192 = vst [vmem:[#allocation2 + $0x8] sm:$0xf] %v190
      %193 = vrot.lane.b32.xlu0 %v147, 16
      %v194 = vpop.permute.xlu0 %193
      %195 = vrot.lane.b32.xlu0 %v158, 16
      %v196 = vpop.permute.xlu0 %195
      %vm197 = vcmp.lt.s32.totalorder %v149, 16
      %v198 = vsel %vm197, %v194, %v196
      %v199 = vsel %vm197, %v196, %v194
      %vm200 = vcmp.ge.s32.totalorder %v153, 0
      %vm201 = vcmp.ge.s32.totalorder %v154, 0
      %vm202 = vmand %vm173, %vm200
      %vm203 = vmand %vm174, %vm201
      %vm204 = vcmp.lt.s32.totalorder %v153, 16
      %vm205 = vcmp.lt.s32.totalorder %v154, 16
      %vm206 = vmand %vm202, %vm204
      %vm207 = vmand %vm203, %vm205
      %v208 = vsel %vm206, 1, 0
      %v209 = vsel %vm207, 1, 0
      %vm210 = vcmp.eq.s32.totalorder %v208, 1
      %vm211 = vcmp.eq.s32.totalorder %v209, 1
      %v212 = vsel %vm210, %v199, 0.0
      %v213 = vsel %vm211, %v198, 0.0
      %v216 = vrot.slane %v212, 4
      %v217 = vrot.slane %v213, 4
      %220 = vst [vmem:[#allocation2] sm:$0xf0] %v216
      %221 = vst [vmem:[#allocation2 + $0x8] sm:$0xf0] %v217
      %222 = vrot.lane.b32.xlu0 %v147, 15
      %v223 = vpop.permute.xlu0 %222
      %224 = vrot.lane.b32.xlu0 %v158, 15
      %v225 = vpop.permute.xlu0 %224
      %vm226 = vcmp.lt.s32.totalorder %v149, 15
      %v227 = vsel %vm226, %v223, %v225
      %v228 = vsel %vm226, %v225, %v223
      %v229 = vadd.s32 %v153, 1
      %v230 = vadd.s32 %v154, 1
      %vm231 = vcmp.ge.s32.totalorder %v229, 0
      %vm232 = vcmp.ge.s32.totalorder %v230, 0
      %vm233 = vmand %vm173, %vm231
      %vm234 = vmand %vm174, %vm232
      %vm235 = vcmp.lt.s32.totalorder %v229, 16
      %vm236 = vcmp.lt.s32.totalorder %v230, 16
      %vm237 = vmand %vm233, %vm235
      %vm238 = vmand %vm234, %vm236
      %v239 = vsel %vm237, 1, 0
      %v240 = vsel %vm238, 1, 0
      %vm241 = vcmp.eq.s32.totalorder %v239, 1
      %vm242 = vcmp.eq.s32.totalorder %v240, 1
      %v243 = vsel %vm241, %v228, 0.0
      %v244 = vsel %vm242, %v227, 0.0
      %245 = vst [vmem:[#allocation2 + $0x10] sm:$0xf] %v243
      %246 = vst [vmem:[#allocation2 + $0x18] sm:$0xf] %v244
      %247 = vrot.lane.b32.xlu0 %v147, 1
      %v248 = vpop.permute.xlu0 %247
      %249 = vrot.lane.b32.xlu0 %v158, 1
      %v250 = vpop.permute.xlu0 %249
      %vm251 = vcmp.lt.s32.totalorder %v149, 1
      %v252 = vsel %vm251, %v248, %v250
      %v253 = vsel %vm251, %v250, %v248
      %vm254 = vcmp.ge.s32.totalorder %v155, 0
      %vm255 = vcmp.ge.s32.totalorder %v156, 0
      %vm256 = vcmp.lt.s32.totalorder %v155, 16
      %vm257 = vcmp.lt.s32.totalorder %v156, 16
      %vm258 = vmand %vm254, %vm256
      %vm259 = vmand %vm255, %vm257
      %vm260 = vmand %vm258, %vm177
      %vm261 = vmand %vm259, %vm178
      %vm262 = vmand %vm260, %vm181
      %vm263 = vmand %vm261, %vm182
      %v264 = vsel %vm262, 1, 0
      %v265 = vsel %vm263, 1, 0
      %vm266 = vcmp.eq.s32.totalorder %v264, 1
      %vm267 = vcmp.eq.s32.totalorder %v265, 1
      %v268 = vsel %vm266, %v253, 0.0
      %v269 = vsel %vm267, %v252, 0.0
      %v272 = vrot.slane %v268, 4
      %v273 = vrot.slane %v269, 4
      %276 = vst [vmem:[#allocation2 + $0x10] sm:$0xf0] %v272
      %277 = vst [vmem:[#allocation2 + $0x18] sm:$0xf0] %v273
      %278 = vst [vmem:[#allocation2 + $0x20] sm:$0xf] %v147
      %279 = vst [vmem:[#allocation2 + $0x28] sm:$0xf] %v158
      %280 = vrot.lane.b32.xlu0 %v147, 127
      %v281 = vpop.permute.xlu0 %280
      %282 = vrot.lane.b32.xlu0 %v158, 127
      %v283 = vpop.permute.xlu0 %282
      %vm284 = vcmp.lt.s32.totalorder %v149, 127
      %v285 = vsel %vm284, %v281, %v283
      %v286 = vsel %vm284, %v283, %v281
      %vm287 = vmand %vm258, %vm231
      %vm288 = vmand %vm259, %vm232
      %vm289 = vmand %vm287, %vm235
      %vm290 = vmand %vm288, %vm236
      %v291 = vsel %vm289, 1, 0
      %v292 = vsel %vm290, 1, 0
      %vm293 = vcmp.eq.s32.totalorder %v291, 1
      %vm294 = vcmp.eq.s32.totalorder %v292, 1
      %v295 = vsel %vm293, %v285, 0.0
      %v296 = vsel %vm294, %v286, 0.0
      %v299 = vrot.slane %v295, 4
      %v300 = vrot.slane %v296, 4
      %303 = vst [vmem:[#allocation2 + $0x20] sm:$0xf0] %v299
      %304 = vst [vmem:[#allocation2 + $0x28] sm:$0xf0] %v300
      %305 = vrot.lane.b32.xlu0 %v147, 113
      %v306 = vpop.permute.xlu0 %305
      %307 = vrot.lane.b32.xlu0 %v158, 113
      %v308 = vpop.permute.xlu0 %307
      %vm309 = vcmp.lt.s32.totalorder %v149, 113
      %v310 = vsel %vm309, %v306, %v308
      %v311 = vsel %vm309, %v308, %v306
      %v312 = vadd.s32 %v155, 1
      %v313 = vadd.s32 %v156, 1
      %vm314 = vcmp.ge.s32.totalorder %v312, 0
      %vm315 = vcmp.ge.s32.totalorder %v313, 0
      %vm316 = vcmp.lt.s32.totalorder %v312, 16
      %vm317 = vcmp.lt.s32.totalorder %v313, 16
      %vm318 = vmand %vm314, %vm316
      %vm319 = vmand %vm315, %vm317
      %vm320 = vmand %vm318, %vm177
      %vm321 = vmand %vm319, %vm178
      %vm322 = vmand %vm320, %vm181
      %vm323 = vmand %vm321, %vm182
      %v324 = vsel %vm322, 1, 0
      %v325 = vsel %vm323, 1, 0
      %vm326 = vcmp.eq.s32.totalorder %v324, 1
      %vm327 = vcmp.eq.s32.totalorder %v325, 1
      %v328 = vsel %vm326, %v310, 0.0
      %v329 = vsel %vm327, %v311, 0.0
      %330 = vst [vmem:[#allocation2 + $0x30] sm:$0xf] %v328
      %331 = vst [vmem:[#allocation2 + $0x38] sm:$0xf] %v329
      %332 = vrot.lane.b32.xlu0 %v147, 112
      %v333 = vpop.permute.xlu0 %332
      %334 = vrot.lane.b32.xlu0 %v158, 112
      %v335 = vpop.permute.xlu0 %334
      %vm336 = vcmp.lt.s32.totalorder %v149, 112
      %v337 = vsel %vm336, %v333, %v335
      %v338 = vsel %vm336, %v335, %v333
      %vm339 = vmand %vm318, %vm200
      %vm340 = vmand %vm319, %vm201
      %vm341 = vmand %vm339, %vm204
      %vm342 = vmand %vm340, %vm205
      %v343 = vsel %vm341, 1, 0
      %v344 = vsel %vm342, 1, 0
      %vm345 = vcmp.eq.s32.totalorder %v343, 1
      %vm346 = vcmp.eq.s32.totalorder %v344, 1
      %v347 = vsel %vm345, %v337, 0.0
      %v348 = vsel %vm346, %v338, 0.0
      %v351 = vrot.slane %v347, 4
      %v352 = vrot.slane %v348, 4
      %355 = vst [vmem:[#allocation2 + $0x30] sm:$0xf0] %v351
      %356 = vst [vmem:[#allocation2 + $0x38] sm:$0xf0] %v352
      %357 = vrot.lane.b32.xlu0 %v147, 111
      %v358 = vpop.permute.xlu0 %357
      %359 = vrot.lane.b32.xlu0 %v158, 111
      %v360 = vpop.permute.xlu0 %359
      %vm361 = vcmp.lt.s32.totalorder %v149, 111
      %v362 = vsel %vm361, %v358, %v360
      %v363 = vsel %vm361, %v360, %v358
      %vm364 = vmand %vm318, %vm231
      %vm365 = vmand %vm319, %vm232
      %vm366 = vmand %vm364, %vm235
      %vm367 = vmand %vm365, %vm236
      %v368 = vsel %vm366, 1, 0
      %v369 = vsel %vm367, 1, 0
      %vm370 = vcmp.eq.s32.totalorder %v368, 1
      %vm371 = vcmp.eq.s32.totalorder %v369, 1
      %v372 = vsel %vm370, %v362, 0.0
      %v373 = vsel %vm371, %v363, 0.0
      %374 = vst [vmem:[#allocation2 + $0x40] sm:$0xf] %v372
      %375 = vst [vmem:[#allocation2 + $0x48] sm:$0xf] %v373
      %v376 = vld [vmem:[%s1] sm:$0xf]
      %v377 = vld [vmem:[#allocation2] sm:$0xff]
      %v378 = vld [vmem:[#allocation2 + $0x8] sm:$0xff]
      %v379 = vld [vmem:[#allocation2 + $0x10] sm:$0xff]
      %v380 = vld [vmem:[#allocation2 + $0x18] sm:$0xff]
      %v381 = vld [vmem:[#allocation2 + $0x20] sm:$0xff]
      %v382 = vld [vmem:[#allocation2 + $0x28] sm:$0xff]
      %v383 = vld [vmem:[#allocation2 + $0x30] sm:$0xff]
      %v384 = vld [vmem:[#allocation2 + $0x38] sm:$0xff]
      %v385 = vld [vmem:[#allocation2 + $0x40] sm:$0xf]
      %v386 = vld [vmem:[#allocation2 + $0x48] sm:$0xf]
      %vm387 = vcmask 293888
      %v389 = vsel %vm387, %v376, 0
      %vm391 = vcmask 1043456
      %v393 = vsel %vm391, %v385, 0
      %v396 = vsel %vm391, %v386, 0
      %398 = vmatprep.subr.mxu0 %v378
      %399 = vmatpush1.msra.mxu0 %v377
      %400 = vmatprep.subr.mxu0 %v380
      %401 = vmatpush1.msra.mxu0 %v379
      %402 = vmatprep.subr.mxu0 %v382
      %403 = vmatpush1.msra.mxu0 %v381
      %404 = vmatprep.subr.mxu0 %v384
      %405 = vmatpush1.msra.mxu0 %v383
      %406 = vmatprep.subr.mxu0 %v396
      %407 = vmatpush1.msra.mxu0 %v393
      %408 = vmatprep.subr.mxu0 0.0
      %409 = vmatpush1.msra.mxu0 0.0
      %410 = vmatprep.subr.mxu0 0.0
      %411 = vmatpush1.msra.mxu0 0.0
      %412 = vmatprep.subr.mxu0 0.0
      %413 = vmatpush1.msra.mxu0 0.0
      %414 = vmatprep.subr.mxu0 0.0
      %415 = vmatpush1.msra.mxu0 0.0
      %416 = vmatprep.subr.mxu0 0.0
      %417 = vmatpush1.msra.mxu0 0.0
      %418 = vmatprep.subr.mxu0 0.0
      %419 = vmatpush1.msra.mxu0 0.0
      %420 = vmatprep.subr.mxu0 0.0
      %421 = vmatpush1.msra.mxu0 0.0
      %422 = vmatprep.subr.mxu0 0.0
      %423 = vmatpush1.msra.mxu0 0.0
      %424 = vmatprep.subr.mxu0 0.0
      %425 = vmatpush1.msra.mxu0 0.0
      %426 = vmatprep.subr.mxu0 0.0
      %427 = vmatpush1.msra.mxu0 0.0
      %428 = vmatprep.subr.mxu0 0.0
      %429 = vmatpush1.msra.mxu0 0.0
      %430 = vmatprep.subr.mxu0 0.0
      %431 = vmatpush1.msra.mxu0 0.0
      %432 = vmatprep.subr.mxu0 0.0
      %433 = vmatpush1.msra.mxu0 0.0
      %434 = vmatprep.subr.mxu0 0.0
      %435 = vmatpush1.msra.mxu0 0.0
      %436 = vmatprep.subr.mxu0 0.0
      %437 = vmatpush1.msra.mxu0 0.0
      %438 = vmatprep.subr.mxu0 0.0
      %439 = vmatpush1.msra.mxu0 0.0
      %440 = vmatprep.subr.mxu0 0.0
      %441 = vmatpush1.msra.mxu0 0.0
      %442 = vmatprep.subr.mxu0 0.0
      %443 = vmatpush1.msra.mxu0 0.0
      %444 = vmatprep.subr.mxu0 0.0
      %445 = vmatpush1.msra.mxu0 0.0
      %446 = vmatprep.subr.mxu0 0.0
      %447 = vmatpush1.msra.mxu0 0.0
      %448 = vmatprep.subr.mxu0 0.0
      %449 = vmatpush1.msra.mxu0 0.0
      %450 = vmatprep.subr.mxu0 0.0
      %451 = vmatpush1.msra.mxu0 0.0
      %452 = vmatprep.subr.mxu0 0.0
      %453 = vmatpush1.msra.mxu0 0.0
      %454 = vmatprep.subr.mxu0 0.0
      %455 = vmatpush1.msra.mxu0 0.0
      %456 = vmatprep.subr.mxu0 0.0
      %457 = vmatpush1.msra.mxu0 0.0
      %458 = vmatprep.subr.mxu0 0.0
      %459 = vmatpush1.msra.mxu0 0.0
      %460 = vmatprep.subr.mxu0 0.0
      %461 = vmatpush1.msra.mxu0 0.0
      %462 = vmatprep.mubr.f32.mxu0 0.0
      %463 = vmatmul.mubr.f32.gmra.mrb[0].mxu0 %v389
      %v464 = vpop.f32.mrb[0].mxu0
      %v465 = vadd.f32 0.0, %v464
      %v466 = vpop.f32.mrb[0].mxu0
      %v467 = vadd.f32 0.0, %v466
      %468 = vdwg.mxu0
      %v471 = vcombine.low %v465, %v467
      %473 = vst [vmem:[%s145] sm:$0xff] %v471
      %s474 = smul.u32 2, %s13
      %p475 = scmp.lt.s32.totalorder %s474, 3
      %s476 = scalar_select %p475, %s474, 3
      %s477 = smul.addr %s476, 4
      %s478 = scalar_lea.vmem %s2, %s477
      // Predicated region
      $region29: #{repvgg_block_forward.1} parent=27 // pred_check
        %p479 = pneg %p78
      $region30: #{repvgg_block_forward.1} parent=27 // pred_check_branch
        %481 = sbr.rel (%p479) target = $region32
      $region31: #{repvgg_block_forward.1} parent=27 // pred_region
        %s482 = smul.u32 2, %s13
      $region32: #{repvgg_block_forward.1} parent=27 // pred_fallthru
        _
    $region28: #{repvgg_block_forward.1} parent=5 // pred_fallthru
      _
    %p483 = scmp.le.s32.totalorder 2, %s8
    // Predicated region
    $region33: #{repvgg_block_forward.1} parent=5 // pred_check
      %p484 = pneg %p483
    $region34: #{repvgg_block_forward.1} parent=5 // pred_check_branch
      %486 = sbr.rel (%p484) target = $region36
    $region35: #{repvgg_block_forward.1} parent=5 // pred_region
      %s487 = ssub.s32 %s8, 2
      // Predicated region
      $region37: #{repvgg_block_forward.1} parent=35 // pred_check
        %p488 = pneg %p84
      $region38: #{repvgg_block_forward.1} parent=35 // pred_check_branch
        %490 = sbr.rel (%p488) target = $region40
      $region39: #{repvgg_block_forward.1} parent=35 // pred_region
        %s491 = smul.u32 2, %s14
        %p492 = scmp.lt.s32.totalorder %s491, 3
        %s493 = scalar_select %p492, %s491, 3
        %s494 = smul.addr %s493, 4
        %s495 = scalar_lea.vmem %s2, %s494
      $region40: #{repvgg_block_forward.1} parent=35 // pred_fallthru
        _
    $region36: #{repvgg_block_forward.1} parent=5 // pred_fallthru
      _
  $region6: #{repvgg_block_forward.1} parent=0 // loop_footer
    %s12 = sadd.s32 1, %s8
  $region7: #{repvgg_block_forward.1} parent=0 // loop_footer_branch
    %7 = sbr.rel target = $region3
  $region8: #{repvgg_block_forward.1} parent=0 // loop_exit
    _

</llo_original>
